<compile_context>
chip_gen: v5e
topology: v5e:2x2
jax: 0.10.0
libtpu: 0.0.40
codegen_flags: <defaults>
</compile_context>

<pallas_src>
import jax
import jax.numpy as jnp
from jax.experimental import pallas as pl
from jax.experimental.pallas import tpu as pltpu

# ---------------------------------------------------------------------------
# Model hyper-parameters (small, consistent with the module's __init__).
# ---------------------------------------------------------------------------
B = 2              # batch
C_IN = 16          # params['dim_in']
MLP = (32, 32)     # params['mlp']
N = 64             # number of points (dim 2 of feats)
A = 8              # params['kanchor'] (number of anchors)
TEMPERATURE = 3.0  # params['temperature']
OUT_CHANNEL = 4    # 'quat'
NOUT = 1 + OUT_CHANNEL   # attention logit row + 4 quaternion rows (merged out)

H1, H2 = MLP
M = N * A                       # flattened (points, anchors) lane axis per batch
PACK_ROWS = max(H1, H2, NOUT)   # 32
PACK_LANES = 128                # lane-dense, contiguous weight DMA (zero-padded)


def _so3_out_block_kernel(x_ref, wp_ref, out_ref):
    # x_ref : (B, C_IN, M) bf16 -- native channels-first layout, lane-dense M
    # wp_ref: (3, PACK_ROWS, 128) bf16 packed [weight | bias | 0-pad] slabs
    # out_ref: (B, NOUT, A) f32 -> row 0 = confidence, rows 1..4 = quaternion

    # Lane-concatenate the B per-batch slabs in VMEM: (C_IN, B*M).
    x = jnp.concatenate([x_ref[b] for b in range(B)], axis=1)

    w1 = wp_ref[0, :H1, :C_IN]                                   # (H1, C_IN) bf16
    b1 = wp_ref[0, :H1, C_IN:C_IN + 1].astype(jnp.float32)       # (H1, 1)
    w2 = wp_ref[1, :H2, :H1]                                     # (H2, H1)  bf16
    b2 = wp_ref[1, :H2, H1:H1 + 1].astype(jnp.float32)           # (H2, 1)
    wo = wp_ref[2, :NOUT, :H2]                                   # (NOUT, H2) bf16
    bo = wp_ref[2, :NOUT, H2:H2 + 1].astype(jnp.float32)         # (NOUT, 1)

    # ---- MLP of 1x1 convs + ReLU: lane-dense 2-D MXU matmuls (f32 accum) ---
    h = jnp.maximum(jnp.dot(w1, x, preferred_element_type=jnp.float32) + b1, 0.0)
    h = jnp.maximum(
        jnp.dot(w2, h.astype(jnp.bfloat16), preferred_element_type=jnp.float32) + b2,
        0.0)

    # ---- attention + regressor (linear): applied BEFORE the mean pool ------
    # Bias is added after the pool (commutes with the mean).
    y = jnp.dot(wo, h.astype(jnp.bfloat16),
                preferred_element_type=jnp.float32)              # (NOUT, B*M)

    inv_n = 1.0 / float(N)
    for b in range(B):                                           # static unroll
        # ---- mean over the N points of batch b: lane m = n*A + a, fold by halves
        yb = y[:, b * M:(b + 1) * M]                             # (NOUT, M)
        width = M
        while width > A:                                         # log2(N) lane adds
            half = width // 2
            yb = yb[:, :half] + yb[:, half:width]
            width = half
        pooled = yb * inv_n + bo                                 # (NOUT, A) f32

        # ---- softmax over anchors on the attention row ----------------------
        logits = pooled[0:1, :] * TEMPERATURE
        mx = jnp.max(logits, axis=1, keepdims=True)
        e = jnp.exp(logits - mx)
        # approx reciprocal (EUP): confidences sum to 1 only to ~2^-12.
        conf = e * pl.reciprocal(jnp.sum(e, axis=1, keepdims=True), approx=True)

        out_ref[b, 0:1, :] = conf                                # confidence row
        out_ref[b, 1:NOUT, :] = pooled[1:NOUT, :]                # quaternion rows


def pack_params(params):
    """One-time packing of the four (weight, bias) pairs into a single bf16 tensor."""
    w1, b1, w2, b2, wa, ba, wr, br = params
    wo = jnp.concatenate([wa, wr], axis=0)           # (NOUT, H2)
    bo = jnp.concatenate([ba, br], axis=0)           # (NOUT,)
    pack = jnp.zeros((3, PACK_ROWS, PACK_LANES), jnp.float32)
    pack = pack.at[0, :H1, :C_IN].set(w1).at[0, :H1, C_IN].set(b1)
    pack = pack.at[1, :H2, :H1].set(w2).at[1, :H2, H1].set(b2)
    pack = pack.at[2, :NOUT, :H2].set(wo).at[2, :NOUT, H2].set(bo)
    return pack.astype(jnp.bfloat16)


@jax.jit
def so3_out_block_r(feats, wpack):
    """feats: (B, C_IN, N, A) float32 (torch NCHW-style). Returns dict like the module."""
    # Trailing-dim merge is layout-preserving; cast to bf16 halves the kernel's
    # input DMA (MXU operands are bf16, accumulation stays f32 in-kernel).
    x2 = feats.reshape(B, C_IN, M).astype(jnp.bfloat16)

    out = pl.pallas_call(
        _so3_out_block_kernel,
        out_shape=jax.ShapeDtypeStruct((B, NOUT, A), jnp.float32),
        grid_spec=pltpu.PrefetchScalarGridSpec(
            num_scalar_prefetch=0,
            grid=(1,),                               # single grid step: one launch,
            in_specs=[                               # one input DMA, one output DMA
                pl.BlockSpec((B, C_IN, M), lambda i: (0, 0, 0)),
                pl.BlockSpec((3, PACK_ROWS, PACK_LANES), lambda i: (0, 0, 0)),
            ],
            out_specs=pl.BlockSpec((B, NOUT, A), lambda i: (0, 0, 0)),
        ),
        compiler_params=pltpu.CompilerParams(dimension_semantics=("arbitrary",)),
    )(x2, wpack)

    confidence = out[:, 0, :]          # (B, A)    == softmax(...).squeeze(1)
    R = out[:, 1:, :]                  # (B, 4, A) == regressor_layer(x_out)
    # TODO(synk): pred_t=False in this config, so output['T'] is None (no kernel work).
    return {'1': confidence, 'R': R, 'T': None}


def _init_params(key):
    """Deterministic synthetic weights, torch Conv orientation (out_ch, in_ch)."""
    keys = jax.random.split(key, 8)
    s = 0.1
    w1 = s * jax.random.normal(keys[0], (H1, C_IN), jnp.float32)
    b1 = s * jax.random.normal(keys[1], (H1,), jnp.float32)
    w2 = s * jax.random.normal(keys[2], (H2, H1), jnp.float32)
    b2 = s * jax.random.normal(keys[3], (H2,), jnp.float32)
    wa = s * jax.random.normal(keys[4], (1, H2), jnp.float32)
    ba = s * jax.random.normal(keys[5], (1,), jnp.float32)
    wr = s * jax.random.normal(keys[6], (OUT_CHANNEL, H2), jnp.float32)
    br = s * jax.random.normal(keys[7], (OUT_CHANNEL,), jnp.float32)
    return (w1, b1, w2, b2, wa, ba, wr, br)


def _reference(feats, params):
    """Pure-JAX f32 reference mirroring the PyTorch forward."""
    w1, b1, w2, b2, wa, ba, wr, br = params
    h = jnp.einsum('oc,bcna->bona', w1, feats) + b1[None, :, None, None]
    h = jax.nn.relu(h)
    h = jnp.einsum('oc,bcna->bona', w2, h) + b2[None, :, None, None]
    h = jax.nn.relu(h)
    pooled = h.mean(axis=2)                                              # (B, H2, A)
    attn = jnp.einsum('oc,bca->boa', wa, pooled) + ba[None, :, None]     # (B, 1, A)
    conf = jax.nn.softmax(attn * TEMPERATURE, axis=2)[:, 0, :]           # (B, A)
    r = jnp.einsum('oc,bca->boa', wr, pooled) + br[None, :, None]        # (B, 4, A)
    return conf, r


if __name__ == "__main__":
    assert N > 0 and (N & (N - 1)) == 0, "lane-fold mean pooling assumes N is a power of two"

    key = jax.random.PRNGKey(0)
    k_x, k_p = jax.random.split(key)
    feats = jax.random.normal(k_x, (B, C_IN, N, A), jnp.float32)
    params = _init_params(k_p)
    wpack = pack_params(params)

    out = so3_out_block_r(feats, wpack)
    conf = jax.block_until_ready(out['1'])
    R = jax.block_until_ready(out['R'])

    conf_ref, r_ref = _reference(feats, params)
    assert conf.shape == (B, A) and R.shape == (B, OUT_CHANNEL, A)
    # Tolerance relaxed to 1e-2: MXU operands are bf16 (~2^-8 operand rounding)
    # vs the f32 PyTorch-equivalent reference; accumulation/pool/softmax stay f32.
    assert jnp.allclose(conf, conf_ref, rtol=1e-2, atol=1e-2)
    assert jnp.allclose(R, r_ref, rtol=1e-2, atol=1e-2)
    print("KERNEL_OK")
</pallas_src>

<mosaic_0001>
module attributes {stable_mosaic.version = 11 : i64} {
  func.func @_so3_out_block_kernel(%arg0: i32, %arg1: memref<2x16x512xbf16, #tpu.memory_space<vmem>>, %arg2: memref<3x32x128xbf16, #tpu.memory_space<vmem>>, %arg3: memref<2x5x8xf32, #tpu.memory_space<vmem>>) attributes {dimension_semantics = [#tpu.dimension_semantics<arbitrary>], iteration_bounds = array<i64: 1>, scalar_prefetch = 0 : i64, scratch_operands = 0 : i64, tpu.core_type = #tpu.core_type<tc>, window_params = [{pipeline_mode = #tpu.pipeline_mode<synchronous>, transform_indices = @transform_0, window_bounds = array<i64: 2, 16, 512>}, {pipeline_mode = #tpu.pipeline_mode<synchronous>, transform_indices = @transform_1, window_bounds = array<i64: 3, 32, 128>}, {pipeline_mode = #tpu.pipeline_mode<synchronous>, transform_indices = @transform_2, window_bounds = array<i64: 2, 5, 8>}]} {
    %c0 = arith.constant 0 : index
    %c0_0 = arith.constant 0 : index
    %c0_1 = arith.constant 0 : index
    %0 = vector.load %arg1[%c0, %c0_0, %c0_1] : memref<2x16x512xbf16, #tpu.memory_space<vmem>>, vector<1x16x512xbf16>
    %1 = vector.shape_cast %0 : vector<1x16x512xbf16> to vector<16x512xbf16>
    %c1 = arith.constant 1 : index
    %c0_2 = arith.constant 0 : index
    %c0_3 = arith.constant 0 : index
    %2 = vector.load %arg1[%c1, %c0_2, %c0_3] : memref<2x16x512xbf16, #tpu.memory_space<vmem>>, vector<1x16x512xbf16>
    %3 = vector.shape_cast %2 : vector<1x16x512xbf16> to vector<16x512xbf16>
    %4 = tpu.concatenate %1, %3 in 1 : vector<16x512xbf16>, vector<16x512xbf16> -> vector<16x1024xbf16>
    %c0_4 = arith.constant 0 : index
    %c0_5 = arith.constant 0 : index
    %c0_6 = arith.constant 0 : index
    %5 = vector.load %arg2[%c0_4, %c0_5, %c0_6] : memref<3x32x128xbf16, #tpu.memory_space<vmem>>, vector<1x32x16xbf16>
    %6 = vector.shape_cast %5 : vector<1x32x16xbf16> to vector<32x16xbf16>
    %c0_7 = arith.constant 0 : index
    %c0_8 = arith.constant 0 : index
    %c16 = arith.constant 16 : index
    %7 = vector.load %arg2[%c0_7, %c0_8, %c16] : memref<3x32x128xbf16, #tpu.memory_space<vmem>>, vector<1x32x1xbf16>
    %8 = vector.shape_cast %7 : vector<1x32x1xbf16> to vector<32x1xbf16>
    %9 = arith.extf %8 : vector<32x1xbf16> to vector<32x1xf32>
    %c1_9 = arith.constant 1 : index
    %c0_10 = arith.constant 0 : index
    %c0_11 = arith.constant 0 : index
    %10 = vector.load %arg2[%c1_9, %c0_10, %c0_11] : memref<3x32x128xbf16, #tpu.memory_space<vmem>>, vector<1x32x32xbf16>
    %11 = vector.shape_cast %10 : vector<1x32x32xbf16> to vector<32x32xbf16>
    %c1_12 = arith.constant 1 : index
    %c0_13 = arith.constant 0 : index
    %c32 = arith.constant 32 : index
    %12 = vector.load %arg2[%c1_12, %c0_13, %c32] : memref<3x32x128xbf16, #tpu.memory_space<vmem>>, vector<1x32x1xbf16>
    %13 = vector.shape_cast %12 : vector<1x32x1xbf16> to vector<32x1xbf16>
    %14 = arith.extf %13 : vector<32x1xbf16> to vector<32x1xf32>
    %c2 = arith.constant 2 : index
    %c0_14 = arith.constant 0 : index
    %c0_15 = arith.constant 0 : index
    %15 = vector.load %arg2[%c2, %c0_14, %c0_15] : memref<3x32x128xbf16, #tpu.memory_space<vmem>>, vector<1x5x32xbf16>
    %16 = vector.shape_cast %15 : vector<1x5x32xbf16> to vector<5x32xbf16>
    %c2_16 = arith.constant 2 : index
    %c0_17 = arith.constant 0 : index
    %c32_18 = arith.constant 32 : index
    %17 = vector.load %arg2[%c2_16, %c0_17, %c32_18] : memref<3x32x128xbf16, #tpu.memory_space<vmem>>, vector<1x5x1xbf16>
    %18 = vector.shape_cast %17 : vector<1x5x1xbf16> to vector<5x1xbf16>
    %19 = arith.extf %18 : vector<5x1xbf16> to vector<5x1xf32>
    %cst = arith.constant dense<0.000000e+00> : vector<32x1024xf32>
    %20 = tpu.matmul %6, %4, %cst {dimension_numbers = #tpu.dot_dimension_numbers<[1], [0], [0], [1], [0, 0, 1, 1], [], []>} : vector<32x16xbf16>, vector<16x1024xbf16>, vector<32x1024xf32> -> vector<32x1024xf32>
    %21 = vector.broadcast %9 : vector<32x1xf32> to vector<32x1024xf32>
    %22 = arith.addf %20, %21 : vector<32x1024xf32>
    %cst_19 = arith.constant 0.000000e+00 : f32
    %23 = vector.broadcast %cst_19 : f32 to vector<32x1024xf32>
    %24 = arith.maximumf %22, %23 : vector<32x1024xf32>
    %25 = arith.truncf %24 : vector<32x1024xf32> to vector<32x1024xbf16>
    %cst_20 = arith.constant dense<0.000000e+00> : vector<32x1024xf32>
    %26 = tpu.matmul %11, %25, %cst_20 {dimension_numbers = #tpu.dot_dimension_numbers<[1], [0], [0], [1], [0, 0, 1, 1], [], []>} : vector<32x32xbf16>, vector<32x1024xbf16>, vector<32x1024xf32> -> vector<32x1024xf32>
    %27 = vector.broadcast %14 : vector<32x1xf32> to vector<32x1024xf32>
    %28 = arith.addf %26, %27 : vector<32x1024xf32>
    %cst_21 = arith.constant 0.000000e+00 : f32
    %29 = vector.broadcast %cst_21 : f32 to vector<32x1024xf32>
    %30 = arith.maximumf %28, %29 : vector<32x1024xf32>
    %31 = arith.truncf %30 : vector<32x1024xf32> to vector<32x1024xbf16>
    %cst_22 = arith.constant dense<0.000000e+00> : vector<5x1024xf32>
    %32 = tpu.matmul %16, %31, %cst_22 {dimension_numbers = #tpu.dot_dimension_numbers<[1], [0], [0], [1], [0, 0, 1, 1], [], []>} : vector<5x32xbf16>, vector<32x1024xbf16>, vector<5x1024xf32> -> vector<5x1024xf32>
    %33 = vector.extract_strided_slice %32 {offsets = [0, 0], sizes = [5, 512], strides = [1, 1]} : vector<5x1024xf32> to vector<5x512xf32>
    %34 = vector.extract_strided_slice %33 {offsets = [0, 0], sizes = [5, 256], strides = [1, 1]} : vector<5x512xf32> to vector<5x256xf32>
    %35 = vector.extract_strided_slice %33 {offsets = [0, 256], sizes = [5, 256], strides = [1, 1]} : vector<5x512xf32> to vector<5x256xf32>
    %36 = arith.addf %34, %35 : vector<5x256xf32>
    %37 = vector.extract_strided_slice %36 {offsets = [0, 0], sizes = [5, 128], strides = [1, 1]} : vector<5x256xf32> to vector<5x128xf32>
    %38 = vector.extract_strided_slice %36 {offsets = [0, 128], sizes = [5, 128], strides = [1, 1]} : vector<5x256xf32> to vector<5x128xf32>
    %39 = arith.addf %37, %38 : vector<5x128xf32>
    %40 = vector.extract_strided_slice %39 {offsets = [0, 0], sizes = [5, 64], strides = [1, 1]} : vector<5x128xf32> to vector<5x64xf32>
    %41 = vector.extract_strided_slice %39 {offsets = [0, 64], sizes = [5, 64], strides = [1, 1]} : vector<5x128xf32> to vector<5x64xf32>
    %42 = arith.addf %40, %41 : vector<5x64xf32>
    %43 = vector.extract_strided_slice %42 {offsets = [0, 0], sizes = [5, 32], strides = [1, 1]} : vector<5x64xf32> to vector<5x32xf32>
    %44 = vector.extract_strided_slice %42 {offsets = [0, 32], sizes = [5, 32], strides = [1, 1]} : vector<5x64xf32> to vector<5x32xf32>
    %45 = arith.addf %43, %44 : vector<5x32xf32>
    %46 = vector.extract_strided_slice %45 {offsets = [0, 0], sizes = [5, 16], strides = [1, 1]} : vector<5x32xf32> to vector<5x16xf32>
    %47 = vector.extract_strided_slice %45 {offsets = [0, 16], sizes = [5, 16], strides = [1, 1]} : vector<5x32xf32> to vector<5x16xf32>
    %48 = arith.addf %46, %47 : vector<5x16xf32>
    %49 = vector.extract_strided_slice %48 {offsets = [0, 0], sizes = [5, 8], strides = [1, 1]} : vector<5x16xf32> to vector<5x8xf32>
    %50 = vector.extract_strided_slice %48 {offsets = [0, 8], sizes = [5, 8], strides = [1, 1]} : vector<5x16xf32> to vector<5x8xf32>
    %51 = arith.addf %49, %50 : vector<5x8xf32>
    %cst_23 = arith.constant 1.562500e-02 : f32
    %52 = vector.broadcast %cst_23 : f32 to vector<5x8xf32>
    %53 = arith.mulf %51, %52 : vector<5x8xf32>
    %54 = vector.broadcast %19 : vector<5x1xf32> to vector<5x8xf32>
    %55 = arith.addf %53, %54 : vector<5x8xf32>
    %56 = vector.extract_strided_slice %55 {offsets = [0, 0], sizes = [1, 8], strides = [1, 1]} : vector<5x8xf32> to vector<1x8xf32>
    %cst_24 = arith.constant 3.000000e+00 : f32
    %57 = vector.broadcast %cst_24 : f32 to vector<1x8xf32>
    %58 = arith.mulf %56, %57 : vector<1x8xf32>
    %cst_25 = arith.constant dense<0xFF800000> : vector<1xf32>
    %59 = vector.multi_reduction <maximumf>, %58, %cst_25 [1] : vector<1x8xf32> to vector<1xf32>
    %60 = vector.shape_cast %59 : vector<1xf32> to vector<1x1xf32>
    %61 = vector.broadcast %60 : vector<1x1xf32> to vector<1x8xf32>
    %62 = arith.subf %58, %61 : vector<1x8xf32>
    %63 = math.exp %62 : vector<1x8xf32>
    %cst_26 = arith.constant dense<0.000000e+00> : vector<1xf32>
    %64 = vector.multi_reduction <add>, %63, %cst_26 [1] : vector<1x8xf32> to vector<1xf32>
    %65 = vector.shape_cast %64 : vector<1xf32> to vector<1x1xf32>
    %66 = tpu.reciprocal %65 {approx = true} : vector<1x1xf32> -> vector<1x1xf32>
    %67 = vector.broadcast %66 : vector<1x1xf32> to vector<1x8xf32>
    %68 = arith.mulf %63, %67 : vector<1x8xf32>
    %c0_27 = arith.constant 0 : index
    %c0_28 = arith.constant 0 : index
    %c0_29 = arith.constant 0 : index
    %69 = vector.load %arg3[%c0_27, %c0_28, %c0_29] : memref<2x5x8xf32, #tpu.memory_space<vmem>>, vector<1x1x8xf32>
    %70 = vector.shape_cast %69 : vector<1x1x8xf32> to vector<1x8xf32>
    %71 = vector.shape_cast %68 : vector<1x8xf32> to vector<1x1x8xf32>
    tpu.vector_store %arg3[%c0_27, %c0_28, %c0_29], %71 {strides = array<i32>} : memref<2x5x8xf32, #tpu.memory_space<vmem>>, vector<1x1x8xf32>,
    %72 = vector.extract_strided_slice %55 {offsets = [1, 0], sizes = [4, 8], strides = [1, 1]} : vector<5x8xf32> to vector<4x8xf32>
    %c0_30 = arith.constant 0 : index
    %c1_31 = arith.constant 1 : index
    %c0_32 = arith.constant 0 : index
    %73 = vector.load %arg3[%c0_30, %c1_31, %c0_32] : memref<2x5x8xf32, #tpu.memory_space<vmem>>, vector<1x4x8xf32>
    %74 = vector.shape_cast %73 : vector<1x4x8xf32> to vector<4x8xf32>
    %75 = vector.shape_cast %72 : vector<4x8xf32> to vector<1x4x8xf32>
    tpu.vector_store %arg3[%c0_30, %c1_31, %c0_32], %75 {strides = array<i32>} : memref<2x5x8xf32, #tpu.memory_space<vmem>>, vector<1x4x8xf32>,
    %76 = vector.extract_strided_slice %32 {offsets = [0, 512], sizes = [5, 512], strides = [1, 1]} : vector<5x1024xf32> to vector<5x512xf32>
    %77 = vector.extract_strided_slice %76 {offsets = [0, 0], sizes = [5, 256], strides = [1, 1]} : vector<5x512xf32> to vector<5x256xf32>
    %78 = vector.extract_strided_slice %76 {offsets = [0, 256], sizes = [5, 256], strides = [1, 1]} : vector<5x512xf32> to vector<5x256xf32>
    %79 = arith.addf %77, %78 : vector<5x256xf32>
    %80 = vector.extract_strided_slice %79 {offsets = [0, 0], sizes = [5, 128], strides = [1, 1]} : vector<5x256xf32> to vector<5x128xf32>
    %81 = vector.extract_strided_slice %79 {offsets = [0, 128], sizes = [5, 128], strides = [1, 1]} : vector<5x256xf32> to vector<5x128xf32>
    %82 = arith.addf %80, %81 : vector<5x128xf32>
    %83 = vector.extract_strided_slice %82 {offsets = [0, 0], sizes = [5, 64], strides = [1, 1]} : vector<5x128xf32> to vector<5x64xf32>
    %84 = vector.extract_strided_slice %82 {offsets = [0, 64], sizes = [5, 64], strides = [1, 1]} : vector<5x128xf32> to vector<5x64xf32>
    %85 = arith.addf %83, %84 : vector<5x64xf32>
    %86 = vector.extract_strided_slice %85 {offsets = [0, 0], sizes = [5, 32], strides = [1, 1]} : vector<5x64xf32> to vector<5x32xf32>
    %87 = vector.extract_strided_slice %85 {offsets = [0, 32], sizes = [5, 32], strides = [1, 1]} : vector<5x64xf32> to vector<5x32xf32>
    %88 = arith.addf %86, %87 : vector<5x32xf32>
    %89 = vector.extract_strided_slice %88 {offsets = [0, 0], sizes = [5, 16], strides = [1, 1]} : vector<5x32xf32> to vector<5x16xf32>
    %90 = vector.extract_strided_slice %88 {offsets = [0, 16], sizes = [5, 16], strides = [1, 1]} : vector<5x32xf32> to vector<5x16xf32>
    %91 = arith.addf %89, %90 : vector<5x16xf32>
    %92 = vector.extract_strided_slice %91 {offsets = [0, 0], sizes = [5, 8], strides = [1, 1]} : vector<5x16xf32> to vector<5x8xf32>
    %93 = vector.extract_strided_slice %91 {offsets = [0, 8], sizes = [5, 8], strides = [1, 1]} : vector<5x16xf32> to vector<5x8xf32>
    %94 = arith.addf %92, %93 : vector<5x8xf32>
    %cst_33 = arith.constant 1.562500e-02 : f32
    %95 = vector.broadcast %cst_33 : f32 to vector<5x8xf32>
    %96 = arith.mulf %94, %95 : vector<5x8xf32>
    %97 = vector.broadcast %19 : vector<5x1xf32> to vector<5x8xf32>
    %98 = arith.addf %96, %97 : vector<5x8xf32>
    %99 = vector.extract_strided_slice %98 {offsets = [0, 0], sizes = [1, 8], strides = [1, 1]} : vector<5x8xf32> to vector<1x8xf32>
    %cst_34 = arith.constant 3.000000e+00 : f32
    %100 = vector.broadcast %cst_34 : f32 to vector<1x8xf32>
    %101 = arith.mulf %99, %100 : vector<1x8xf32>
    %cst_35 = arith.constant dense<0xFF800000> : vector<1xf32>
    %102 = vector.multi_reduction <maximumf>, %101, %cst_35 [1] : vector<1x8xf32> to vector<1xf32>
    %103 = vector.shape_cast %102 : vector<1xf32> to vector<1x1xf32>
    %104 = vector.broadcast %103 : vector<1x1xf32> to vector<1x8xf32>
    %105 = arith.subf %101, %104 : vector<1x8xf32>
    %106 = math.exp %105 : vector<1x8xf32>
    %cst_36 = arith.constant dense<0.000000e+00> : vector<1xf32>
    %107 = vector.multi_reduction <add>, %106, %cst_36 [1] : vector<1x8xf32> to vector<1xf32>
    %108 = vector.shape_cast %107 : vector<1xf32> to vector<1x1xf32>
    %109 = tpu.reciprocal %108 {approx = true} : vector<1x1xf32> -> vector<1x1xf32>
    %110 = vector.broadcast %109 : vector<1x1xf32> to vector<1x8xf32>
    %111 = arith.mulf %106, %110 : vector<1x8xf32>
    %c1_37 = arith.constant 1 : index
    %c0_38 = arith.constant 0 : index
    %c0_39 = arith.constant 0 : index
    %112 = vector.load %arg3[%c1_37, %c0_38, %c0_39] : memref<2x5x8xf32, #tpu.memory_space<vmem>>, vector<1x1x8xf32>
    %113 = vector.shape_cast %112 : vector<1x1x8xf32> to vector<1x8xf32>
    %114 = vector.shape_cast %111 : vector<1x8xf32> to vector<1x1x8xf32>
    tpu.vector_store %arg3[%c1_37, %c0_38, %c0_39], %114 {strides = array<i32>} : memref<2x5x8xf32, #tpu.memory_space<vmem>>, vector<1x1x8xf32>,
    %115 = vector.extract_strided_slice %98 {offsets = [1, 0], sizes = [4, 8], strides = [1, 1]} : vector<5x8xf32> to vector<4x8xf32>
    %c1_40 = arith.constant 1 : index
    %c1_41 = arith.constant 1 : index
    %c0_42 = arith.constant 0 : index
    %116 = vector.load %arg3[%c1_40, %c1_41, %c0_42] : memref<2x5x8xf32, #tpu.memory_space<vmem>>, vector<1x4x8xf32>
    %117 = vector.shape_cast %116 : vector<1x4x8xf32> to vector<4x8xf32>
    %118 = vector.shape_cast %115 : vector<4x8xf32> to vector<1x4x8xf32>
    tpu.vector_store %arg3[%c1_40, %c1_41, %c0_42], %118 {strides = array<i32>} : memref<2x5x8xf32, #tpu.memory_space<vmem>>, vector<1x4x8xf32>,
    return
  }
  func.func @transform_0(%arg0: i32) -> (i32, i32, i32) {
    %c0_i32 = arith.constant 0 : i32
    %c0_i32_0 = arith.constant 0 : i32
    %c0_i32_1 = arith.constant 0 : i32
    %c0_i32_2 = arith.constant 0 : i32
    return %c0_i32, %c0_i32_0, %c0_i32_1 : i32, i32, i32
  }
  func.func @transform_1(%arg0: i32) -> (i32, i32, i32) {
    %c0_i32 = arith.constant 0 : i32
    %c0_i32_0 = arith.constant 0 : i32
    %c0_i32_1 = arith.constant 0 : i32
    %c0_i32_2 = arith.constant 0 : i32
    return %c0_i32, %c0_i32_0, %c0_i32_1 : i32, i32, i32
  }
  func.func @transform_2(%arg0: i32) -> (i32, i32, i32) {
    %c0_i32 = arith.constant 0 : i32
    %c0_i32_0 = arith.constant 0 : i32
    %c0_i32_1 = arith.constant 0 : i32
    %c0_i32_2 = arith.constant 0 : i32
    return %c0_i32, %c0_i32_0, %c0_i32_1 : i32, i32, i32
  }
}

</mosaic_0001>

<llo_original>
// kernel: so3_out_block_r.1
$region0: #{so3_out_block_r.1}
  #allocation0 [shape = 'u32[]', space=smem, size = 0x4, offset = 0x4, fixed_abs, tag = 'smem constant byte address 0x4 - core index']
  #allocation1 [shape = 'u32[72,128]{1,0:T(1,128)}', space=vmem, size = 0x9000, scoped, tag = 'internal scratch']
  %s0 = inlined_call_operand.vmem [shape: bf16[2,16,512], index: 0, kind: input, shape index: {}]
  %s1 = inlined_call_operand.vmem [shape: bf16[3,32,128], index: 1, kind: input, shape index: {}]
  %s2 = inlined_call_operand.vmem [shape: f32[2,5,8], index: 2, kind: output, shape index: {}]
  %s3 = sld [smem:[#allocation0]]
  $region18: #{so3_out_block_r.1} parent=0
    _
  %s5 = ssub.s32 1, %s3
  %s6 = scalar_select 0, %s5, %s3
  // Predicated region
  $region2: #{so3_out_block_r.1} parent=0 // pred_check
    _
  $region3: #{so3_out_block_r.1} parent=0 // pred_check_branch
    %8 = sbr.rel (0) target = $region5
  $region4: #{so3_out_block_r.1} parent=0 // pred_region
    _
  $region5: #{so3_out_block_r.1} parent=0 // pred_fallthru
    _
  // Predicated region
  $region6: #{so3_out_block_r.1} parent=0 // pred_check
    _
  $region7: #{so3_out_block_r.1} parent=0 // pred_check_branch
    %10 = sbr.rel (0) target = $region9
  $region8: #{so3_out_block_r.1} parent=0 // pred_region
    _
  $region9: #{so3_out_block_r.1} parent=0 // pred_fallthru
    _
  %v12 = vld [vmem:[%s0] sm:$0xff]
  %v13 = vld [vmem:[%s0 + $0x8] sm:$0xff]
  %v14 = vld [vmem:[%s0 + $0x10] sm:$0xff]
  %v15 = vld [vmem:[%s0 + $0x18] sm:$0xff]
  %s16 = scalar_lea.vmem %s0, 32
  %v17 = vld [vmem:[%s16] sm:$0xff]
  %v18 = vld [vmem:[%s16 + $0x8] sm:$0xff]
  %v19 = vld [vmem:[%s16 + $0x10] sm:$0xff]
  %v20 = vld [vmem:[%s16 + $0x18] sm:$0xff]
  %v25 = vunpack.c.l.b16 %v12
  %v26 = vunpack.c.h.b16 %v12
  %v27 = vunpack.c.l.b16 %v13
  %v28 = vunpack.c.h.b16 %v13
  %v29 = vunpack.c.l.b16 %v14
  %v30 = vunpack.c.h.b16 %v14
  %v31 = vunpack.c.l.b16 %v15
  %v32 = vunpack.c.h.b16 %v15
  %v33 = vpack.c.b16 %v29, %v25
  %v34 = vpack.c.b16 %v30, %v26
  %v35 = vpack.c.b16 %v31, %v27
  %v36 = vpack.c.b16 %v32, %v28
  %v45 = vunpack.c.l.b16 %v17
  %v46 = vunpack.c.h.b16 %v17
  %v47 = vunpack.c.l.b16 %v18
  %v48 = vunpack.c.h.b16 %v18
  %v49 = vunpack.c.l.b16 %v19
  %v50 = vunpack.c.h.b16 %v19
  %v51 = vunpack.c.l.b16 %v20
  %v52 = vunpack.c.h.b16 %v20
  %v53 = vpack.c.b16 %v49, %v45
  %v54 = vpack.c.b16 %v50, %v46
  %v55 = vpack.c.b16 %v51, %v47
  %v56 = vpack.c.b16 %v52, %v48
  %v61 = vld [vmem:[%s1] sm:$0xf]
  %v62 = vld [vmem:[%s1 + $0x4] sm:$0xf]
  %v63 = vld [vmem:[%s1 + $0x8] sm:$0xf]
  %v64 = vld [vmem:[%s1 + $0xc] sm:$0xf]
  %v65 = vunpack.c.l.bf16 %v61
  %v66 = vunpack.c.l.bf16 %v62
  %v67 = vunpack.c.l.bf16 %v63
  %v68 = vunpack.c.l.bf16 %v64
  %s69 = scalar_lea.vmem %s1, 16
  %v70 = vld [vmem:[%s69] sm:$0xf]
  %v71 = vld [vmem:[%s69 + $0x4] sm:$0xf]
  %v72 = vld [vmem:[%s69 + $0x8] sm:$0xf]
  %v73 = vld [vmem:[%s69 + $0xc] sm:$0xf]
  %v74 = vunpack.c.l.bf16 %v70
  %v75 = vunpack.c.l.bf16 %v71
  %v76 = vunpack.c.l.bf16 %v72
  %v77 = vunpack.c.l.bf16 %v73
  %s78 = scalar_lea.vmem %s1, 32
  %v79 = vld [vmem:[%s78] sm:$0x7]
  %v80 = vunpack.c.l.bf16 %v79
  %82 = vset.pattern.permute.xlu0 16
  %83 = vperm.xlu0 %82, %v65
  %v84 = vpop.permute.xlu0 %83
  %87 = vset.pattern.permute.xlu0 16
  %88 = vperm.xlu0 %87, %v66
  %v89 = vpop.permute.xlu0 %88
  %92 = vset.pattern.permute.xlu0 16
  %93 = vperm.xlu0 %92, %v67
  %v94 = vpop.permute.xlu0 %93
  %97 = vset.pattern.permute.xlu0 16
  %98 = vperm.xlu0 %97, %v68
  %v99 = vpop.permute.xlu0 %98
  %v105 = vunpack.c.l.b16 %v61
  %v106 = vunpack.c.l.b16 %v62
  %v107 = vunpack.c.l.b16 %v63
  %v108 = vunpack.c.l.b16 %v64
  %v109 = vpack.c.b16 %v106, %v105
  %v110 = vpack.c.b16 %v108, %v107
  %vm111 = vcmask 130048
  %v113 = vsel %vm111, %v109, 0
  %v116 = vsel %vm111, %v110, 0
  %118 = vmatpush.bf16.msra.mxu0 0
  %119 = vmatpush.bf16.msra.mxu0 0
  %120 = vmatpush.bf16.msra.mxu0 0
  %121 = vmatpush.bf16.msra.mxu0 0
  %122 = vmatpush.bf16.msra.mxu0 0
  %123 = vmatpush.bf16.msra.mxu0 0
  %124 = vmatpush.bf16.msra.mxu0 0
  %125 = vmatpush.bf16.msra.mxu0 %v33
  %126 = vmatmul.bf16.gmra.mxu0 %v113
  %v127 = vpop.f32.mrf.mxu0
  %v128 = vadd.f32 %v84, %v127
  %v129 = vpop.f32.mrf.mxu0
  %v130 = vadd.f32 %v89, %v129
  %131 = vmatmul.bf16.gmra.mxu0 %v116
  %v132 = vpop.f32.mrf.mxu0
  %v133 = vadd.f32 %v94, %v132
  %v134 = vpop.f32.mrf.mxu0
  %v135 = vadd.f32 %v99, %v134
  %136 = vdwg.mxu0
  %137 = vmatpush.bf16.msra.mxu0 0
  %138 = vmatpush.bf16.msra.mxu0 0
  %139 = vmatpush.bf16.msra.mxu0 0
  %140 = vmatpush.bf16.msra.mxu0 0
  %141 = vmatpush.bf16.msra.mxu0 0
  %142 = vmatpush.bf16.msra.mxu0 0
  %143 = vmatpush.bf16.msra.mxu0 0
  %144 = vmatpush.bf16.msra.mxu0 %v34
  %145 = vmatmul.bf16.gmra.mxu0 %v113
  %v146 = vpop.f32.mrf.mxu0
  %v147 = vadd.f32 %v84, %v146
  %v148 = vpop.f32.mrf.mxu0
  %v149 = vadd.f32 %v89, %v148
  %150 = vmatmul.bf16.gmra.mxu0 %v116
  %v151 = vpop.f32.mrf.mxu0
  %v152 = vadd.f32 %v94, %v151
  %v153 = vpop.f32.mrf.mxu0
  %v154 = vadd.f32 %v99, %v153
  %155 = vdwg.mxu0
  %156 = vmatpush.bf16.msra.mxu0 0
  %157 = vmatpush.bf16.msra.mxu0 0
  %158 = vmatpush.bf16.msra.mxu0 0
  %159 = vmatpush.bf16.msra.mxu0 0
  %160 = vmatpush.bf16.msra.mxu0 0
  %161 = vmatpush.bf16.msra.mxu0 0
  %162 = vmatpush.bf16.msra.mxu0 0
  %163 = vmatpush.bf16.msra.mxu0 %v35
  %164 = vmatmul.bf16.gmra.mxu0 %v113
  %v165 = vpop.f32.mrf.mxu0
  %v166 = vadd.f32 %v84, %v165
  %v167 = vpop.f32.mrf.mxu0
  %v168 = vadd.f32 %v89, %v167
  %169 = vmatmul.bf16.gmra.mxu0 %v116
  %v170 = vpop.f32.mrf.mxu0
  %v171 = vadd.f32 %v94, %v170
  %v172 = vpop.f32.mrf.mxu0
  %v173 = vadd.f32 %v99, %v172
  %174 = vdwg.mxu0
  %175 = vmatpush.bf16.msra.mxu0 0
  %176 = vmatpush.bf16.msra.mxu0 0
  %177 = vmatpush.bf16.msra.mxu0 0
  %178 = vmatpush.bf16.msra.mxu0 0
  %179 = vmatpush.bf16.msra.mxu0 0
  %180 = vmatpush.bf16.msra.mxu0 0
  %181 = vmatpush.bf16.msra.mxu0 0
  %182 = vmatpush.bf16.msra.mxu0 %v36
  %183 = vmatmul.bf16.gmra.mxu0 %v113
  %v184 = vpop.f32.mrf.mxu0
  %v185 = vadd.f32 %v84, %v184
  %v186 = vpop.f32.mrf.mxu0
  %v187 = vadd.f32 %v89, %v186
  %188 = vmatmul.bf16.gmra.mxu0 %v116
  %v189 = vpop.f32.mrf.mxu0
  %v190 = vadd.f32 %v94, %v189
  %v191 = vpop.f32.mrf.mxu0
  %v192 = vadd.f32 %v99, %v191
  %193 = vdwg.mxu0
  %194 = vmatpush.bf16.msra.mxu0 0
  %195 = vmatpush.bf16.msra.mxu0 0
  %196 = vmatpush.bf16.msra.mxu0 0
  %197 = vmatpush.bf16.msra.mxu0 0
  %198 = vmatpush.bf16.msra.mxu0 0
  %199 = vmatpush.bf16.msra.mxu0 0
  %200 = vmatpush.bf16.msra.mxu0 0
  %201 = vmatpush.bf16.msra.mxu0 %v53
  %202 = vmatmul.bf16.gmra.mxu0 %v113
  %v203 = vpop.f32.mrf.mxu0
  %v204 = vadd.f32 %v84, %v203
  %v205 = vpop.f32.mrf.mxu0
  %v206 = vadd.f32 %v89, %v205
  %207 = vmatmul.bf16.gmra.mxu0 %v116
  %v208 = vpop.f32.mrf.mxu0
  %v209 = vadd.f32 %v94, %v208
  %v210 = vpop.f32.mrf.mxu0
  %v211 = vadd.f32 %v99, %v210
  %212 = vdwg.mxu0
  %213 = vmatpush.bf16.msra.mxu0 0
  %214 = vmatpush.bf16.msra.mxu0 0
  %215 = vmatpush.bf16.msra.mxu0 0
  %216 = vmatpush.bf16.msra.mxu0 0
  %217 = vmatpush.bf16.msra.mxu0 0
  %218 = vmatpush.bf16.msra.mxu0 0
  %219 = vmatpush.bf16.msra.mxu0 0
  %220 = vmatpush.bf16.msra.mxu0 %v54
  %221 = vmatmul.bf16.gmra.mxu0 %v113
  %v222 = vpop.f32.mrf.mxu0
  %v223 = vadd.f32 %v84, %v222
  %v224 = vpop.f32.mrf.mxu0
  %v225 = vadd.f32 %v89, %v224
  %226 = vmatmul.bf16.gmra.mxu0 %v116
  %v227 = vpop.f32.mrf.mxu0
  %v228 = vadd.f32 %v94, %v227
  %v229 = vpop.f32.mrf.mxu0
  %v230 = vadd.f32 %v99, %v229
  %231 = vdwg.mxu0
  %232 = vmatpush.bf16.msra.mxu0 0
  %233 = vmatpush.bf16.msra.mxu0 0
  %234 = vmatpush.bf16.msra.mxu0 0
  %235 = vmatpush.bf16.msra.mxu0 0
  %236 = vmatpush.bf16.msra.mxu0 0
  %237 = vmatpush.bf16.msra.mxu0 0
  %238 = vmatpush.bf16.msra.mxu0 0
  %239 = vmatpush.bf16.msra.mxu0 %v55
  %240 = vmatmul.bf16.gmra.mxu0 %v113
  %v241 = vpop.f32.mrf.mxu0
  %v242 = vadd.f32 %v84, %v241
  %v243 = vpop.f32.mrf.mxu0
  %v244 = vadd.f32 %v89, %v243
  %245 = vmatmul.bf16.gmra.mxu0 %v116
  %v246 = vpop.f32.mrf.mxu0
  %v247 = vadd.f32 %v94, %v246
  %v248 = vpop.f32.mrf.mxu0
  %v249 = vadd.f32 %v99, %v248
  %250 = vdwg.mxu0
  %251 = vmatpush.bf16.msra.mxu0 0
  %252 = vmatpush.bf16.msra.mxu0 0
  %253 = vmatpush.bf16.msra.mxu0 0
  %254 = vmatpush.bf16.msra.mxu0 0
  %255 = vmatpush.bf16.msra.mxu0 0
  %256 = vmatpush.bf16.msra.mxu0 0
  %257 = vmatpush.bf16.msra.mxu0 0
  %258 = vmatpush.bf16.msra.mxu0 %v56
  %259 = vmatmul.bf16.gmra.mxu0 %v113
  %v260 = vpop.f32.mrf.mxu0
  %v261 = vadd.f32 %v84, %v260
  %v262 = vpop.f32.mrf.mxu0
  %v263 = vadd.f32 %v89, %v262
  %264 = vmatmul.bf16.gmra.mxu0 %v116
  %v265 = vpop.f32.mrf.mxu0
  %v266 = vadd.f32 %v94, %v265
  %v267 = vpop.f32.mrf.mxu0
  %v268 = vadd.f32 %v99, %v267
  %269 = vdwg.mxu0
  %v270 = vmax.f32 %v128, 0.0
  %v271 = vmax.f32 %v147, 0.0
  %v272 = vmax.f32 %v166, 0.0
  %v273 = vmax.f32 %v185, 0.0
  %v274 = vmax.f32 %v204, 0.0
  %v275 = vmax.f32 %v223, 0.0
  %v276 = vmax.f32 %v242, 0.0
  %v277 = vmax.f32 %v261, 0.0
  %v278 = vmax.f32 %v130, 0.0
  %v279 = vmax.f32 %v149, 0.0
  %v280 = vmax.f32 %v168, 0.0
  %v281 = vmax.f32 %v187, 0.0
  %v282 = vmax.f32 %v206, 0.0
  %v283 = vmax.f32 %v225, 0.0
  %v284 = vmax.f32 %v244, 0.0
  %v285 = vmax.f32 %v263, 0.0
  %v286 = vmax.f32 %v133, 0.0
  %v287 = vmax.f32 %v152, 0.0
  %v288 = vmax.f32 %v171, 0.0
  %v289 = vmax.f32 %v190, 0.0
  %v290 = vmax.f32 %v209, 0.0
  %v291 = vmax.f32 %v228, 0.0
  %v292 = vmax.f32 %v247, 0.0
  %v293 = vmax.f32 %v266, 0.0
  %v294 = vmax.f32 %v135, 0.0
  %v295 = vmax.f32 %v154, 0.0
  %v296 = vmax.f32 %v173, 0.0
  %v297 = vmax.f32 %v192, 0.0
  %v298 = vmax.f32 %v211, 0.0
  %v299 = vmax.f32 %v230, 0.0
  %v300 = vmax.f32 %v249, 0.0
  %v301 = vmax.f32 %v268, 0.0
  %v302 = vpack.c.bf16 %v278, %v270
  %v303 = vpack.c.bf16 %v279, %v271
  %v304 = vpack.c.bf16 %v280, %v272
  %v305 = vpack.c.bf16 %v281, %v273
  %v306 = vpack.c.bf16 %v282, %v274
  %v307 = vpack.c.bf16 %v283, %v275
  %v308 = vpack.c.bf16 %v284, %v276
  %v309 = vpack.c.bf16 %v285, %v277
  %v310 = vpack.c.bf16 %v294, %v286
  %v311 = vpack.c.bf16 %v295, %v287
  %v312 = vpack.c.bf16 %v296, %v288
  %v313 = vpack.c.bf16 %v297, %v289
  %v314 = vpack.c.bf16 %v298, %v290
  %v315 = vpack.c.bf16 %v299, %v291
  %v316 = vpack.c.bf16 %v300, %v292
  %v317 = vpack.c.bf16 %v301, %v293
  %319 = vset.pattern.permute.xlu0 32
  %320 = vperm.xlu0 %319, %v74
  %v321 = vpop.permute.xlu0 %320
  %324 = vset.pattern.permute.xlu0 32
  %325 = vperm.xlu0 %324, %v75
  %v326 = vpop.permute.xlu0 %325
  %329 = vset.pattern.permute.xlu0 32
  %330 = vperm.xlu0 %329, %v76
  %v331 = vpop.permute.xlu0 %330
  %334 = vset.pattern.permute.xlu0 32
  %335 = vperm.xlu0 %334, %v77
  %v336 = vpop.permute.xlu0 %335
  %v342 = vunpack.c.l.b16 %v70
  %v343 = vunpack.c.l.b16 %v71
  %v344 = vunpack.c.l.b16 %v72
  %v345 = vunpack.c.l.b16 %v73
  %v346 = vpack.c.b16 %v343, %v342
  %v347 = vpack.c.b16 %v345, %v344
  %vm348 = vcmask 261120
  %v350 = vsel %vm348, %v346, 0
  %v353 = vsel %vm348, %v347, 0
  %355 = vmatpush.bf16.msra.mxu0 0
  %356 = vmatpush.bf16.msra.mxu0 0
  %357 = vmatpush.bf16.msra.mxu0 0
  %358 = vmatpush.bf16.msra.mxu0 0
  %359 = vmatpush.bf16.msra.mxu0 0
  %360 = vmatpush.bf16.msra.mxu0 0
  %361 = vmatpush.bf16.msra.mxu0 %v310
  %362 = vmatpush.bf16.msra.mxu0 %v302
  %363 = vmatmul.bf16.gmra.mxu0 %v350
  %v364 = vpop.f32.mrf.mxu0
  %v365 = vadd.f32 %v321, %v364
  %v366 = vpop.f32.mrf.mxu0
  %v367 = vadd.f32 %v326, %v366
  %368 = vmatmul.bf16.gmra.mxu0 %v353
  %v369 = vpop.f32.mrf.mxu0
  %v370 = vadd.f32 %v331, %v369
  %v371 = vpop.f32.mrf.mxu0
  %v372 = vadd.f32 %v336, %v371
  %373 = vdwg.mxu0
  %374 = vmatpush.bf16.msra.mxu0 0
  %375 = vmatpush.bf16.msra.mxu0 0
  %376 = vmatpush.bf16.msra.mxu0 0
  %377 = vmatpush.bf16.msra.mxu0 0
  %378 = vmatpush.bf16.msra.mxu0 0
  %379 = vmatpush.bf16.msra.mxu0 0
  %380 = vmatpush.bf16.msra.mxu0 %v311
  %381 = vmatpush.bf16.msra.mxu0 %v303
  %382 = vmatmul.bf16.gmra.mxu0 %v350
  %v383 = vpop.f32.mrf.mxu0
  %v384 = vadd.f32 %v321, %v383
  %v385 = vpop.f32.mrf.mxu0
  %v386 = vadd.f32 %v326, %v385
  %387 = vmatmul.bf16.gmra.mxu0 %v353
  %v388 = vpop.f32.mrf.mxu0
  %v389 = vadd.f32 %v331, %v388
  %v390 = vpop.f32.mrf.mxu0
  %v391 = vadd.f32 %v336, %v390
  %392 = vdwg.mxu0
  %393 = vmatpush.bf16.msra.mxu0 0
  %394 = vmatpush.bf16.msra.mxu0 0
  %395 = vmatpush.bf16.msra.mxu0 0
  %396 = vmatpush.bf16.msra.mxu0 0
  %397 = vmatpush.bf16.msra.mxu0 0
  %398 = vmatpush.bf16.msra.mxu0 0
  %399 = vmatpush.bf16.msra.mxu0 %v312
  %400 = vmatpush.bf16.msra.mxu0 %v304
  %401 = vmatmul.bf16.gmra.mxu0 %v350
  %v402 = vpop.f32.mrf.mxu0
  %v403 = vadd.f32 %v321, %v402
  %v404 = vpop.f32.mrf.mxu0
  %v405 = vadd.f32 %v326, %v404
  %406 = vmatmul.bf16.gmra.mxu0 %v353
  %v407 = vpop.f32.mrf.mxu0
  %v408 = vadd.f32 %v331, %v407
  %v409 = vpop.f32.mrf.mxu0
  %v410 = vadd.f32 %v336, %v409
  %411 = vdwg.mxu0
  %412 = vmatpush.bf16.msra.mxu0 0
  %413 = vmatpush.bf16.msra.mxu0 0
  %414 = vmatpush.bf16.msra.mxu0 0
  %415 = vmatpush.bf16.msra.mxu0 0
  %416 = vmatpush.bf16.msra.mxu0 0
  %417 = vmatpush.bf16.msra.mxu0 0
  %418 = vmatpush.bf16.msra.mxu0 %v313
  %419 = vmatpush.bf16.msra.mxu0 %v305
  %420 = vmatmul.bf16.gmra.mxu0 %v350
  %v421 = vpop.f32.mrf.mxu0
  %v422 = vadd.f32 %v321, %v421
  %v423 = vpop.f32.mrf.mxu0
  %v424 = vadd.f32 %v326, %v423
  %425 = vmatmul.bf16.gmra.mxu0 %v353
  %v426 = vpop.f32.mrf.mxu0
  %v427 = vadd.f32 %v331, %v426
  %v428 = vpop.f32.mrf.mxu0
  %v429 = vadd.f32 %v336, %v428
  %430 = vdwg.mxu0
  %431 = vmatpush.bf16.msra.mxu0 0
  %432 = vmatpush.bf16.msra.mxu0 0
  %433 = vmatpush.bf16.msra.mxu0 0
  %434 = vmatpush.bf16.msra.mxu0 0
  %435 = vmatpush.bf16.msra.mxu0 0
  %436 = vmatpush.bf16.msra.mxu0 0
  %437 = vmatpush.bf16.msra.mxu0 %v314
  %438 = vmatpush.bf16.msra.mxu0 %v306
  %439 = vmatmul.bf16.gmra.mxu0 %v350
  %v440 = vpop.f32.mrf.mxu0
  %v441 = vadd.f32 %v321, %v440
  %v442 = vpop.f32.mrf.mxu0
  %v443 = vadd.f32 %v326, %v442
  %444 = vmatmul.bf16.gmra.mxu0 %v353
  %v445 = vpop.f32.mrf.mxu0
  %v446 = vadd.f32 %v331, %v445
  %v447 = vpop.f32.mrf.mxu0
  %v448 = vadd.f32 %v336, %v447
  %449 = vdwg.mxu0
  %450 = vmatpush.bf16.msra.mxu0 0
  %451 = vmatpush.bf16.msra.mxu0 0
  %452 = vmatpush.bf16.msra.mxu0 0
  %453 = vmatpush.bf16.msra.mxu0 0
  %454 = vmatpush.bf16.msra.mxu0 0
  %455 = vmatpush.bf16.msra.mxu0 0
  %456 = vmatpush.bf16.msra.mxu0 %v315
  %457 = vmatpush.bf16.msra.mxu0 %v307
  %458 = vmatmul.bf16.gmra.mxu0 %v350
  %v459 = vpop.f32.mrf.mxu0
  %v460 = vadd.f32 %v321, %v459
  %v461 = vpop.f32.mrf.mxu0
  %v462 = vadd.f32 %v326, %v461
  %463 = vmatmul.bf16.gmra.mxu0 %v353
  %v464 = vpop.f32.mrf.mxu0
  %v465 = vadd.f32 %v331, %v464
  %v466 = vpop.f32.mrf.mxu0
  %v467 = vadd.f32 %v336, %v466
  %468 = vdwg.mxu0
  %469 = vmatpush.bf16.msra.mxu0 0
  %470 = vmatpush.bf16.msra.mxu0 0
  %471 = vmatpush.bf16.msra.mxu0 0
  %472 = vmatpush.bf16.msra.mxu0 0
  %473 = vmatpush.bf16.msra.mxu0 0
  %474 = vmatpush.bf16.msra.mxu0 0
  %475 = vmatpush.bf16.msra.mxu0 %v316
  %476 = vmatpush.bf16.msra.mxu0 %v308
  %477 = vmatmul.bf16.gmra.mxu0 %v350
  %v478 = vpop.f32.mrf.mxu0
  %v479 = vadd.f32 %v321, %v478
  %v480 = vpop.f32.mrf.mxu0
  %v481 = vadd.f32 %v326, %v480
  %482 = vmatmul.bf16.gmra.mxu0 %v353
  %v483 = vpop.f32.mrf.mxu0
  %v484 = vadd.f32 %v331, %v483
  %v485 = vpop.f32.mrf.mxu0
  %v486 = vadd.f32 %v336, %v485
  %487 = vdwg.mxu0
  %488 = vmatpush.bf16.msra.mxu0 0
  %489 = vmatpush.bf16.msra.mxu0 0
  %490 = vmatpush.bf16.msra.mxu0 0
  %491 = vmatpush.bf16.msra.mxu0 0
  %492 = vmatpush.bf16.msra.mxu0 0
  %493 = vmatpush.bf16.msra.mxu0 0
  %494 = vmatpush.bf16.msra.mxu0 %v317
  %495 = vmatpush.bf16.msra.mxu0 %v309
  %496 = vmatmul.bf16.gmra.mxu0 %v350
  %v497 = vpop.f32.mrf.mxu0
  %v498 = vadd.f32 %v321, %v497
  %v499 = vpop.f32.mrf.mxu0
  %v500 = vadd.f32 %v326, %v499
  %501 = vmatmul.bf16.gmra.mxu0 %v353
  %v502 = vpop.f32.mrf.mxu0
  %v503 = vadd.f32 %v331, %v502
  %v504 = vpop.f32.mrf.mxu0
  %v505 = vadd.f32 %v336, %v504
  %506 = vdwg.mxu0
  %v507 = vmax.f32 %v365, 0.0
  %v508 = vmax.f32 %v384, 0.0
  %v509 = vmax.f32 %v403, 0.0
  %v510 = vmax.f32 %v422, 0.0
  %v511 = vmax.f32 %v441, 0.0
  %v512 = vmax.f32 %v460, 0.0
  %v513 = vmax.f32 %v479, 0.0
  %v514 = vmax.f32 %v498, 0.0
  %v515 = vmax.f32 %v367, 0.0
  %v516 = vmax.f32 %v386, 0.0
  %v517 = vmax.f32 %v405, 0.0
  %v518 = vmax.f32 %v424, 0.0
  %v519 = vmax.f32 %v443, 0.0
  %v520 = vmax.f32 %v462, 0.0
  %v521 = vmax.f32 %v481, 0.0
  %v522 = vmax.f32 %v500, 0.0
  %v523 = vmax.f32 %v370, 0.0
  %v524 = vmax.f32 %v389, 0.0
  %v525 = vmax.f32 %v408, 0.0
  %v526 = vmax.f32 %v427, 0.0
  %v527 = vmax.f32 %v446, 0.0
  %v528 = vmax.f32 %v465, 0.0
  %v529 = vmax.f32 %v484, 0.0
  %v530 = vmax.f32 %v503, 0.0
  %v531 = vmax.f32 %v372, 0.0
  %v532 = vmax.f32 %v391, 0.0
  %v533 = vmax.f32 %v410, 0.0
  %v534 = vmax.f32 %v429, 0.0
  %v535 = vmax.f32 %v448, 0.0
  %v536 = vmax.f32 %v467, 0.0
  %v537 = vmax.f32 %v486, 0.0
  %v538 = vmax.f32 %v505, 0.0
  %v539 = vpack.c.bf16 %v515, %v507
  %v540 = vpack.c.bf16 %v516, %v508
  %v541 = vpack.c.bf16 %v517, %v509
  %v542 = vpack.c.bf16 %v518, %v510
  %v543 = vpack.c.bf16 %v519, %v511
  %v544 = vpack.c.bf16 %v520, %v512
  %v545 = vpack.c.bf16 %v521, %v513
  %v546 = vpack.c.bf16 %v522, %v514
  %v547 = vpack.c.bf16 %v531, %v523
  %v548 = vpack.c.bf16 %v532, %v524
  %v549 = vpack.c.bf16 %v533, %v525
  %v550 = vpack.c.bf16 %v534, %v526
  %v551 = vpack.c.bf16 %v535, %v527
  %v552 = vpack.c.bf16 %v536, %v528
  %v553 = vpack.c.bf16 %v537, %v529
  %v554 = vpack.c.bf16 %v538, %v530
  %v556 = vsel %vm348, %v79, 0
  %558 = vmatpush.bf16.msra.mxu0 0
  %559 = vmatpush.bf16.msra.mxu0 0
  %560 = vmatpush.bf16.msra.mxu0 0
  %561 = vmatpush.bf16.msra.mxu0 0
  %562 = vmatpush.bf16.msra.mxu0 0
  %563 = vmatpush.bf16.msra.mxu0 0
  %564 = vmatpush.bf16.msra.mxu0 %v547
  %565 = vmatpush.bf16.msra.mxu0 %v539
  %566 = vmatmul.bf16.gmra.mxu0 %v556
  %v567 = vpop.f32.mrf.mxu0
  %v568 = vadd.f32 0.0, %v567
  %v569 = vpop.f32.mrf.mxu0
  %570 = vdwg.mxu0
  %571 = vmatpush.bf16.msra.mxu0 0
  %572 = vmatpush.bf16.msra.mxu0 0
  %573 = vmatpush.bf16.msra.mxu0 0
  %574 = vmatpush.bf16.msra.mxu0 0
  %575 = vmatpush.bf16.msra.mxu0 0
  %576 = vmatpush.bf16.msra.mxu0 0
  %577 = vmatpush.bf16.msra.mxu0 %v548
  %578 = vmatpush.bf16.msra.mxu0 %v540
  %579 = vmatmul.bf16.gmra.mxu0 %v556
  %v580 = vpop.f32.mrf.mxu0
  %v581 = vadd.f32 0.0, %v580
  %v582 = vpop.f32.mrf.mxu0
  %583 = vdwg.mxu0
  %584 = vmatpush.bf16.msra.mxu0 0
  %585 = vmatpush.bf16.msra.mxu0 0
  %586 = vmatpush.bf16.msra.mxu0 0
  %587 = vmatpush.bf16.msra.mxu0 0
  %588 = vmatpush.bf16.msra.mxu0 0
  %589 = vmatpush.bf16.msra.mxu0 0
  %590 = vmatpush.bf16.msra.mxu0 %v549
  %591 = vmatpush.bf16.msra.mxu0 %v541
  %592 = vmatmul.bf16.gmra.mxu0 %v556
  %v593 = vpop.f32.mrf.mxu0
  %v594 = vadd.f32 0.0, %v593
  %v595 = vpop.f32.mrf.mxu0
  %596 = vdwg.mxu0
  %597 = vmatpush.bf16.msra.mxu0 0
  %598 = vmatpush.bf16.msra.mxu0 0
  %599 = vmatpush.bf16.msra.mxu0 0
  %600 = vmatpush.bf16.msra.mxu0 0
  %601 = vmatpush.bf16.msra.mxu0 0
  %602 = vmatpush.bf16.msra.mxu0 0
  %603 = vmatpush.bf16.msra.mxu0 %v550
  %604 = vmatpush.bf16.msra.mxu0 %v542
  %605 = vmatmul.bf16.gmra.mxu0 %v556
  %v606 = vpop.f32.mrf.mxu0
  %v607 = vadd.f32 0.0, %v606
  %v608 = vpop.f32.mrf.mxu0
  %609 = vdwg.mxu0
  %610 = vmatpush.bf16.msra.mxu0 0
  %611 = vmatpush.bf16.msra.mxu0 0
  %612 = vmatpush.bf16.msra.mxu0 0
  %613 = vmatpush.bf16.msra.mxu0 0
  %614 = vmatpush.bf16.msra.mxu0 0
  %615 = vmatpush.bf16.msra.mxu0 0
  %616 = vmatpush.bf16.msra.mxu0 %v551
  %617 = vmatpush.bf16.msra.mxu0 %v543
  %618 = vmatmul.bf16.gmra.mxu0 %v556
  %v619 = vpop.f32.mrf.mxu0
  %v620 = vadd.f32 0.0, %v619
  %v621 = vpop.f32.mrf.mxu0
  %622 = vdwg.mxu0
  %623 = vmatpush.bf16.msra.mxu0 0
  %624 = vmatpush.bf16.msra.mxu0 0
  %625 = vmatpush.bf16.msra.mxu0 0
  %626 = vmatpush.bf16.msra.mxu0 0
  %627 = vmatpush.bf16.msra.mxu0 0
  %628 = vmatpush.bf16.msra.mxu0 0
  %629 = vmatpush.bf16.msra.mxu0 %v552
  %630 = vmatpush.bf16.msra.mxu0 %v544
  %631 = vmatmul.bf16.gmra.mxu0 %v556
  %v632 = vpop.f32.mrf.mxu0
  %v633 = vadd.f32 0.0, %v632
  %v634 = vpop.f32.mrf.mxu0
  %635 = vdwg.mxu0
  %636 = vmatpush.bf16.msra.mxu0 0
  %637 = vmatpush.bf16.msra.mxu0 0
  %638 = vmatpush.bf16.msra.mxu0 0
  %639 = vmatpush.bf16.msra.mxu0 0
  %640 = vmatpush.bf16.msra.mxu0 0
  %641 = vmatpush.bf16.msra.mxu0 0
  %642 = vmatpush.bf16.msra.mxu0 %v553
  %643 = vmatpush.bf16.msra.mxu0 %v545
  %644 = vmatmul.bf16.gmra.mxu0 %v556
  %v645 = vpop.f32.mrf.mxu0
  %v646 = vadd.f32 0.0, %v645
  %v647 = vpop.f32.mrf.mxu0
  %648 = vdwg.mxu0
  %649 = vmatpush.bf16.msra.mxu0 0
  %650 = vmatpush.bf16.msra.mxu0 0
  %651 = vmatpush.bf16.msra.mxu0 0
  %652 = vmatpush.bf16.msra.mxu0 0
  %653 = vmatpush.bf16.msra.mxu0 0
  %654 = vmatpush.bf16.msra.mxu0 0
  %655 = vmatpush.bf16.msra.mxu0 %v554
  %656 = vmatpush.bf16.msra.mxu0 %v546
  %657 = vmatmul.bf16.gmra.mxu0 %v556
  %v658 = vpop.f32.mrf.mxu0
  %v659 = vadd.f32 0.0, %v658
  %v660 = vpop.f32.mrf.mxu0
  %661 = vdwg.mxu0
  %v662 = vadd.f32 %v568, %v594
  %v663 = vadd.f32 %v581, %v607
  %v664 = vadd.f32 %v662, %v663
  %666 = vrot.lane.b32.xlu0 %v664, 64
  %v667 = vpop.permute.xlu0 %666
  %v669 = vadd.f32 %v664, %v667
  %671 = vrot.lane.b32.xlu0 %v669, 96
  %v672 = vpop.permute.xlu0 %671
  %v674 = vadd.f32 %v669, %v672
  %676 = vrot.lane.b32.xlu0 %v674, 112
  %v677 = vpop.permute.xlu0 %676
  %v679 = vadd.f32 %v674, %v677
  %681 = vrot.lane.b32.xlu0 %v679, 120
  %v682 = vpop.permute.xlu0 %681
  %v684 = vadd.f32 %v679, %v682
  %v685 = vmul.f32 %v684, 0.015625
  %687 = vset.pattern.permute.xlu0 32
  %688 = vperm.xlu0 %687, %v80
  %v689 = vpop.permute.xlu0 %688
  %v691 = vadd.f32 %v685, %v689
  %v692 = vmul.f32 %v691, 3.0
  %vm693 = vcmask 57344
  %v694 = vsel %vm693, %v692, -inf
  %695 = vmax.xlane.f32.xlu0 %v694
  %v696 = vpop.xlane.xlu0 %695
  %v697 = vsub.f32 %v692, %v696
  %v698 = vmul.f32 %v697, 1.442695
  %v699 = vpow.pop %v698
  %v700 = vsel %vm693, %v699, 0.0
  %701 = vadd.xlane.f32.xlu0 %v700
  %v702 = vpop.xlane.xlu0 %701
  %v703 = vrcp.pop %v702
  %v704 = vmul.f32 %v699, %v703
  %705 = vst.msk [vmem:[%s2] sm:$0x1] %vm693, %v704
  %vm706 = vcmask 61441
  %707 = vst.msk [vmem:[%s2] sm:$0x1e] %vm706, %v691
  %v708 = vadd.f32 %v620, %v646
  %v709 = vadd.f32 %v633, %v659
  %v710 = vadd.f32 %v708, %v709
  %712 = vrot.lane.b32.xlu0 %v710, 64
  %v713 = vpop.permute.xlu0 %712
  %v715 = vadd.f32 %v710, %v713
  %717 = vrot.lane.b32.xlu0 %v715, 96
  %v718 = vpop.permute.xlu0 %717
  %v720 = vadd.f32 %v715, %v718
  %722 = vrot.lane.b32.xlu0 %v720, 112
  %v723 = vpop.permute.xlu0 %722
  %v725 = vadd.f32 %v720, %v723
  %727 = vrot.lane.b32.xlu0 %v725, 120
  %v728 = vpop.permute.xlu0 %727
  %v730 = vadd.f32 %v725, %v728
  %v731 = vmul.f32 %v730, 0.015625
  %v732 = vadd.f32 %v731, %v689
  %v733 = vmul.f32 %v732, 3.0
  %v734 = vsel %vm693, %v733, -inf
  %735 = vmax.xlane.f32.xlu0 %v734
  %v736 = vpop.xlane.xlu0 %735
  %v737 = vsub.f32 %v733, %v736
  %v738 = vmul.f32 %v737, 1.442695
  %v739 = vpow.pop %v738
  %v740 = vsel %vm693, %v739, 0.0
  %741 = vadd.xlane.f32.xlu0 %v740
  %v742 = vpop.xlane.xlu0 %741
  %v743 = vrcp.pop %v742
  %v744 = vmul.f32 %v739, %v743
  %s745 = scalar_lea.vmem %s2, 8
  %746 = vst.msk [vmem:[%s745] sm:$0x1] %vm693, %v744
  %747 = vst.msk [vmem:[%s745] sm:$0x1e] %vm706, %v732
  // Predicated region
  $region10: #{so3_out_block_r.1} parent=0 // pred_check
    _
  $region11: #{so3_out_block_r.1} parent=0 // pred_check_branch
    %749 = sbr.rel (0) target = $region13
  $region12: #{so3_out_block_r.1} parent=0 // pred_region
    _
  $region13: #{so3_out_block_r.1} parent=0 // pred_fallthru
    _
  // Predicated region
  $region14: #{so3_out_block_r.1} parent=0 // pred_check
    _
  $region15: #{so3_out_block_r.1} parent=0 // pred_check_branch
    %751 = sbr.rel (0) target = $region17
  $region16: #{so3_out_block_r.1} parent=0 // pred_region
    _
  $region17: #{so3_out_block_r.1} parent=0 // pred_fallthru
    _

</llo_original>
